<compile_context>
chip_gen: v7x
topology: tpu7x:2x2x1
jax: 0.10.0
libtpu: 0.0.40
codegen_flags: <defaults>
</compile_context>

<pallas_src>
import jax
import jax.numpy as jnp
from jax.experimental import pallas as pl
from jax.experimental.pallas import tpu as pltpu  # noqa: F401  (kept for TPU-specific tuning hooks)


def linear_bias_relu_kernel(x_ref, w_ref, b_ref, o_ref):
    """out = relu(x @ w + b), with K small enough to do rank-1 VPU updates."""
    k_dim = x_ref.shape[1]                 # static (3)
    x = x_ref[...]                         # (B_pad, K)
    w = w_ref[...]                         # (K, N_pad)
    # start the accumulator from the (already p-folded) bias
    acc = jnp.broadcast_to(b_ref[...], o_ref.shape).astype(jnp.float32)
    for k in range(k_dim):                 # unrolled at trace time (K = 3)
        acc = acc + x[:, k:k + 1] * w[k:k + 1, :]
    o_ref[...] = jnp.maximum(acc, 0.0).astype(o_ref.dtype)


def model_forward(x, w_t, bias, p=1.0):
    """Forward of the PyTorch module.

    x:    (B, IN)  f32
    w_t:  (OUT, IN) f32   -- torch nn.Linear weight layout
    bias: (OUT,)   f32
    returns (B, OUT) f32 = relu(x @ w_t.T + bias - p)
    """
    B, IN = x.shape
    OUT = w_t.shape[0]

    LANES, SUBLANES = 128, 8
    OUT_pad = ((OUT + LANES - 1) // LANES) * LANES          # lane-dense output
    B_pad = ((B + SUBLANES - 1) // SUBLANES) * SUBLANES     # sublane-aligned rows

    # Fold the scalar subtract into the bias: relu(xW + b - p) == relu(xW + (b - p)).
    b_eff = (bias.astype(jnp.float32) - jnp.float32(p))

    # Host-side padding to lane/sublane-friendly shapes (sliced off on return).
    w_pad = jnp.zeros((IN, OUT_pad), jnp.float32).at[:, :OUT].set(w_t.T.astype(jnp.float32))
    b_pad = jnp.zeros((1, OUT_pad), jnp.float32).at[0, :OUT].set(b_eff)
    x_pad = jnp.zeros((B_pad, IN), jnp.float32).at[:B, :].set(x.astype(jnp.float32))

    cost = pl.CostEstimate(
        flops=2 * B_pad * IN * OUT_pad,
        transcendentals=0,
        bytes_accessed=4 * (B_pad * IN + IN * OUT_pad + OUT_pad + B_pad * OUT_pad),
    )

    out_pad = pl.pallas_call(
        linear_bias_relu_kernel,
        out_shape=jax.ShapeDtypeStruct((B_pad, OUT_pad), jnp.float32),
        grid=(1,),
        in_specs=[
            pl.BlockSpec((B_pad, IN), lambda i: (0, 0)),      # x  (full block)
            pl.BlockSpec((IN, OUT_pad), lambda i: (0, 0)),    # w  (full block)
            pl.BlockSpec((1, OUT_pad), lambda i: (0, 0)),     # folded bias
        ],
        out_specs=pl.BlockSpec((B_pad, OUT_pad), lambda i: (0, 0)),
        cost_estimate=cost,
    )(x_pad, w_pad, b_pad)

    return out_pad[:B, :OUT]


if __name__ == "__main__":
    key = jax.random.PRNGKey(0)
    k_x, k_w, k_b = jax.random.split(key, 3)

    B, IN, OUT = 8, 3, 64
    x = jax.random.normal(k_x, (B, IN), dtype=jnp.float32)

    # Deterministic parameter init (mimics torch Linear's uniform range 1/sqrt(IN)).
    bound = 1.0 / jnp.sqrt(jnp.float32(IN))
    w_t = jax.random.uniform(k_w, (OUT, IN), minval=-bound, maxval=bound,
                             dtype=jnp.float32)              # torch layout (OUT, IN)
    bias = jax.random.uniform(k_b, (OUT,), minval=-bound, maxval=bound,
                              dtype=jnp.float32)

    out = model_forward(x, w_t, bias, p=1.0)
    jax.block_until_ready(out)

    # Reference check in plain JAX (matches the PyTorch forward).
    ref = jnp.maximum(x @ w_t.T + bias - 1.0, 0.0)
    assert out.shape == (B, OUT)
    assert jnp.allclose(out, ref, atol=1e-5), "mismatch vs reference"

    print("KERNEL_OK")
</pallas_src>

<mosaic_0001>
module attributes {stable_mosaic.version = 11 : i64} {
  func.func @linear_bias_relu_kernel(%arg0: i32, %arg1: memref<8x3xf32, #tpu.memory_space<vmem>>, %arg2: memref<3x128xf32, #tpu.memory_space<vmem>>, %arg3: memref<1x128xf32, #tpu.memory_space<vmem>>, %arg4: memref<8x128xf32, #tpu.memory_space<vmem>>) attributes {dimension_semantics = [#tpu.dimension_semantics<arbitrary>], iteration_bounds = array<i64: 1>, scalar_prefetch = 0 : i64, scratch_operands = 0 : i64, tpu.core_type = #tpu.core_type<tc>, window_params = [{pipeline_mode = #tpu.pipeline_mode<synchronous>, transform_indices = @transform_0, window_bounds = array<i64: 8, 3>}, {pipeline_mode = #tpu.pipeline_mode<synchronous>, transform_indices = @transform_1, window_bounds = array<i64: 3, 128>}, {pipeline_mode = #tpu.pipeline_mode<synchronous>, transform_indices = @transform_2, window_bounds = array<i64: 1, 128>}, {pipeline_mode = #tpu.pipeline_mode<synchronous>, transform_indices = @transform_3, window_bounds = array<i64: 8, 128>}]} {
    %c0 = arith.constant 0 : index
    %c0_0 = arith.constant 0 : index
    %0 = vector.load %arg1[%c0, %c0_0] : memref<8x3xf32, #tpu.memory_space<vmem>>, vector<8x3xf32>
    %c0_1 = arith.constant 0 : index
    %c0_2 = arith.constant 0 : index
    %1 = vector.load %arg2[%c0_1, %c0_2] : memref<3x128xf32, #tpu.memory_space<vmem>>, vector<3x128xf32>
    %c0_3 = arith.constant 0 : index
    %c0_4 = arith.constant 0 : index
    %2 = vector.load %arg3[%c0_3, %c0_4] : memref<1x128xf32, #tpu.memory_space<vmem>>, vector<1x128xf32>
    %3 = vector.shape_cast %2 : vector<1x128xf32> to vector<1x128xf32>
    %4 = vector.broadcast %3 : vector<1x128xf32> to vector<8x128xf32>
    %5 = vector.extract_strided_slice %0 {offsets = [0, 0], sizes = [8, 1], strides = [1, 1]} : vector<8x3xf32> to vector<8x1xf32>
    %6 = vector.extract_strided_slice %1 {offsets = [0, 0], sizes = [1, 128], strides = [1, 1]} : vector<3x128xf32> to vector<1x128xf32>
    %7 = vector.broadcast %5 : vector<8x1xf32> to vector<8x128xf32>
    %8 = vector.broadcast %6 : vector<1x128xf32> to vector<8x128xf32>
    %9 = arith.mulf %7, %8 : vector<8x128xf32>
    %10 = arith.addf %4, %9 : vector<8x128xf32>
    %11 = vector.extract_strided_slice %0 {offsets = [0, 1], sizes = [8, 1], strides = [1, 1]} : vector<8x3xf32> to vector<8x1xf32>
    %12 = vector.extract_strided_slice %1 {offsets = [1, 0], sizes = [1, 128], strides = [1, 1]} : vector<3x128xf32> to vector<1x128xf32>
    %13 = vector.broadcast %11 : vector<8x1xf32> to vector<8x128xf32>
    %14 = vector.broadcast %12 : vector<1x128xf32> to vector<8x128xf32>
    %15 = arith.mulf %13, %14 : vector<8x128xf32>
    %16 = arith.addf %10, %15 : vector<8x128xf32>
    %17 = vector.extract_strided_slice %0 {offsets = [0, 2], sizes = [8, 1], strides = [1, 1]} : vector<8x3xf32> to vector<8x1xf32>
    %18 = vector.extract_strided_slice %1 {offsets = [2, 0], sizes = [1, 128], strides = [1, 1]} : vector<3x128xf32> to vector<1x128xf32>
    %19 = vector.broadcast %17 : vector<8x1xf32> to vector<8x128xf32>
    %20 = vector.broadcast %18 : vector<1x128xf32> to vector<8x128xf32>
    %21 = arith.mulf %19, %20 : vector<8x128xf32>
    %22 = arith.addf %16, %21 : vector<8x128xf32>
    %cst = arith.constant 0.000000e+00 : f32
    %23 = vector.broadcast %cst : f32 to vector<8x128xf32>
    %24 = arith.maximumf %22, %23 : vector<8x128xf32>
    %c0_5 = arith.constant 0 : index
    %c0_6 = arith.constant 0 : index
    %25 = vector.load %arg4[%c0_5, %c0_6] : memref<8x128xf32, #tpu.memory_space<vmem>>, vector<8x128xf32>
    tpu.vector_store %arg4[%c0_5, %c0_6], %24 {strides = array<i32>} : memref<8x128xf32, #tpu.memory_space<vmem>>, vector<8x128xf32>,
    return
  }
  func.func @transform_0(%arg0: i32) -> (i32, i32) {
    %c0_i32 = arith.constant 0 : i32
    %c0_i32_0 = arith.constant 0 : i32
    %c0_i32_1 = arith.constant 0 : i32
    return %c0_i32, %c0_i32_0 : i32, i32
  }
  func.func @transform_1(%arg0: i32) -> (i32, i32) {
    %c0_i32 = arith.constant 0 : i32
    %c0_i32_0 = arith.constant 0 : i32
    %c0_i32_1 = arith.constant 0 : i32
    return %c0_i32, %c0_i32_0 : i32, i32
  }
  func.func @transform_2(%arg0: i32) -> (i32, i32) {
    %c0_i32 = arith.constant 0 : i32
    %c0_i32_0 = arith.constant 0 : i32
    %c0_i32_1 = arith.constant 0 : i32
    return %c0_i32, %c0_i32_0 : i32, i32
  }
  func.func @transform_3(%arg0: i32) -> (i32, i32) {
    %c0_i32 = arith.constant 0 : i32
    %c0_i32_0 = arith.constant 0 : i32
    %c0_i32_1 = arith.constant 0 : i32
    return %c0_i32, %c0_i32_0 : i32, i32
  }
}

</mosaic_0001>

<llo_original>
// kernel: tpu_custom_call.1
$region0: #{tpu_custom_call.1}
  #allocation0 [shape = 'u32[]', space=smem, size = 0x4, offset = 0x4, fixed_abs, tag = 'smem constant byte address 0x4 - core index']
  #allocation1 [shape = 'u32[144,128]{1,0:T(1,128)}', space=vmem, size = 0x12000, scoped, tag = 'internal scratch']
  %s0 = inlined_call_operand.vmem [shape: f32[8,3], index: 0, kind: input, shape index: {}]
  %s1 = inlined_call_operand.vmem [shape: f32[3,128], index: 1, kind: input, shape index: {}]
  %s2 = inlined_call_operand.vmem [shape: f32[1,128], index: 2, kind: input, shape index: {}]
  %s3 = inlined_call_operand.hbm [shape: f32[8,128], index: 3, kind: output, shape index: {}]
  %s4 = sld [smem:[#allocation0]]
  $region22: #{tpu_custom_call.1} parent=0
    _
  %s6 = ssub.s32 1, %s4
  %s7 = scalar_select 0, %s6, %s4
  $region1: #{tpu_custom_call.1} parent=0
    #allocation2 [shape = 'u8[4096]{0}', space=vmem, size = 0x1000, scoped, tag = 'output window, operand 0, single buffered']
    #allocation3 [shape = 's32[1]{0}', space=sflag, size = 0x4, scoped, tag = 'scoped memory for tpu_custom_call.1']
    %8 = vsyncpa [#allocation3], 0
    // Predicated region
    $region2: #{tpu_custom_call.1} parent=1 // pred_check
      _
    $region3: #{tpu_custom_call.1} parent=1 // pred_check_branch
      %10 = sbr.rel (0) target = $region5
    $region4: #{tpu_custom_call.1} parent=1 // pred_region
      _
    $region5: #{tpu_custom_call.1} parent=1 // pred_fallthru
      _
    // Predicated region
    $region6: #{tpu_custom_call.1} parent=1 // pred_check
      _
    $region7: #{tpu_custom_call.1} parent=1 // pred_check_branch
      %12 = sbr.rel (0) target = $region9
    $region8: #{tpu_custom_call.1} parent=1 // pred_region
      _
    $region9: #{tpu_custom_call.1} parent=1 // pred_fallthru
      _
    // Predicated region
    $region10: #{tpu_custom_call.1} parent=1 // pred_check
      _
    $region11: #{tpu_custom_call.1} parent=1 // pred_check_branch
      %14 = sbr.rel (0) target = $region13
    $region12: #{tpu_custom_call.1} parent=1 // pred_region
      _
    $region13: #{tpu_custom_call.1} parent=1 // pred_fallthru
      _
    %v15 = vld [vmem:[%s0] sm:$0xff]
    %v16 = vld [vmem:[%s1] sm:$0x7]
    %v17 = vld [vmem:[%s2] sm:$0x1]
    %v19 = vlaneseq
    %v20 = vshrl.u32 %v19, 7
    %v21 = vsub.s32 0, %v20
    %v22 = vrot.slane %v17, %v21
    %25 = vset.pattern.permute.xlu0 0
    %26 = vperm.xlu0 %25, %v15
    %v27 = vpop.permute.xlu0 %26
    %v29 = vlaneseq
    %v30 = vshrl.u32 %v29, 7
    %v31 = vsub.s32 0, %v30
    %v32 = vrot.slane %v16, %v31
    %v33 = vmul.f32 %v27, %v32
    %v34 = vadd.f32 %v22, %v33
    %35 = vset.pattern.permute.xlu0 1
    %36 = vperm.xlu0 %35, %v15
    %v37 = vpop.permute.xlu0 %36
    %v39 = vlaneseq
    %v40 = vshrl.u32 %v39, 7
    %v41 = vsub.s32 1, %v40
    %v42 = vrot.slane %v16, %v41
    %v43 = vmul.f32 %v37, %v42
    %v44 = vadd.f32 %v34, %v43
    %45 = vset.pattern.permute.xlu0 2
    %46 = vperm.xlu0 %45, %v15
    %v47 = vpop.permute.xlu0 %46
    %v49 = vlaneseq
    %v50 = vshrl.u32 %v49, 7
    %v51 = vsub.s32 2, %v50
    %v52 = vrot.slane %v16, %v51
    %v53 = vmul.f32 %v47, %v52
    %v54 = vadd.f32 %v44, %v53
    %v55 = vmax.f32 %v54, 0.0
    %56 = vst [vmem:[#allocation2] sm:$0xff] %v55
    // Predicated region
    $region14: #{tpu_custom_call.1} parent=1 // pred_check
      _
    $region15: #{tpu_custom_call.1} parent=1 // pred_check_branch
      %58 = sbr.rel (0) target = $region17
    $region16: #{tpu_custom_call.1} parent=1 // pred_region
      %s60 = ssub.s32 128, 128
      %61 = vsyncadd [#allocation3], %s60
      %s63 = sshll.u32 [#allocation2], 4
      %s64 = int_to_ptr.vmem [resolvable:$true] %s63
      %66 = dma.vmem_to_hbm [thread:$0]  %s64, 128, %s3, [#allocation3]
    $region17: #{tpu_custom_call.1} parent=1 // pred_fallthru
      _
    // Predicated region
    $region18: #{tpu_custom_call.1} parent=1 // pred_check
      _
    $region19: #{tpu_custom_call.1} parent=1 // pred_check_branch
      %68 = sbr.rel (0) target = $region21
    $region20: #{tpu_custom_call.1} parent=1 // pred_region
      %69 = dma.done [#allocation3], 128
    $region21: #{tpu_custom_call.1} parent=1 // pred_fallthru
      _
    %70 = vsyncpa [#allocation3], 1

</llo_original>
